<compile_context>
chip_gen: v6e
topology: v6e:2x2x1
jax: 0.10.0
libtpu: 0.0.40
codegen_flags: <defaults>
</compile_context>

<pallas_src>
import functools
from dataclasses import dataclass

import numpy as np
import jax
import jax.numpy as jnp
from jax.experimental import pallas as pl
from jax.experimental.pallas import tpu as pltpu

PI = float(np.pi)
INTERP_PI = 6                      # sinc taps, offsets -3..2 (as in the PyTorch code)


@dataclass
class WKAConfig:
    Vr: float = 100.0      # platform velocity
    theta_c: float = 0.1   # squint angle
    lamda: float = 3.0     # wavelength
    Fr: float = 50.0       # range sampling rate
    Fa: float = 20.0       # azimuth sampling rate (PRF)
    R_ref: float = 10.0    # reference range
    c: float = 300.0       # propagation speed (scaled for f32 friendliness)
    f0: float = 100.0      # carrier frequency (scaled)
    Kr: float = 20.0       # chirp rate
    Na: int = 64           # azimuth samples
    Nr: int = 128          # range samples


# --------------------------- small runtime capability probes ---------------------------
@functools.cache
def _pltpu_roll_is_numpy_convention() -> bool:
    """Probe the lane-rotation sign convention of pltpu.roll once (eagerly).

    Makes the clamped-tap gather robust across JAX versions: with the np.roll
    convention out[j] = in[(j - shift) % N]; otherwise out[j] = in[(j + shift) % N].
    Must be called outside jit (cached, so later traced calls just read the bool).
    """
    def probe(x_ref, o_ref):
        o_ref[...] = pltpu.roll(x_ref[...], 1, axis=1)

    x = jnp.broadcast_to(jnp.arange(128, dtype=jnp.float32)[None, :], (8, 128))
    y = pl.pallas_call(probe, out_shape=jax.ShapeDtypeStruct((8, 128), jnp.float32))(x)
    return bool(y[0, 0] == 127.0)


@functools.cache
def _num_tensorcores_per_chip() -> int:
    """Heuristic TC count per chip: v7x has 2 TensorCores, v5e/v6e have 1."""
    try:
        kind = jax.devices()[0].device_kind.lower()
    except Exception:
        return 1
    return 2 if "v7" in kind else 1


# ------------------------------------ Pallas kernel ------------------------------------
def _wka_kernel(sre_ref, sim_ref, out_ref, *,
                Vr, R_ref, c, f0, Kr, Fr, Fa, f_eta_ref, Na, Nr, tile_na,
                emit_intermediates, roll_like_numpy):
    sre = sre_ref[...]            # (tile_na, Nr)  real(S_2df)
    sim = sim_ref[...]            # (tile_na, Nr)  imag(S_2df)

    # ---- frequency grids generated in-kernel (pure linspaces; no input DMA) ----
    jcol = jax.lax.broadcasted_iota(jnp.int32, (1, Nr), 1)            # column index
    irow = (jax.lax.broadcasted_iota(jnp.int32, (tile_na, 1), 0)
            + pl.program_id(0) * tile_na)                             # global row index
    f_tau = jcol.astype(jnp.float32) * (Fr / (Nr - 1)) - (Fr / 2.0)   # (1, Nr)
    f_eta = (irow.astype(jnp.float32) * (Fa / (Na - 1))
             + (f_eta_ref - Fa / 2.0))                                # (tile_na, 1)

    # ---- matched filtering: sig * exp(1j * phase) ----
    # NOTE: no clamp on the sqrt argument, to keep exact PyTorch semantics
    # (default config keeps it strictly positive; other configs may NaN, as in torch).
    root = jnp.sqrt((f0 + f_tau) ** 2 - ((c / (2.0 * Vr)) * f_eta) ** 2)   # (tn, Nr)
    phase = (4.0 * PI * R_ref / c) * root + (PI / Kr) * (f_tau * f_tau)
    cph = jnp.cos(phase)
    sph = jnp.sin(phase)
    mre = sre * cph - sim * sph
    mim = sre * sph + sim * cph
    if emit_intermediates:
        out_ref[:, 0 * Nr:1 * Nr] = mre
        out_ref[:, 1 * Nr:2 * Nr] = mim

    # ---- Stolt interpolation: 6-tap clamped sinc interpolation along range ----
    delta_n = (root - f0 - f_tau) * (float(Nr) / Fr)        # (tn, Nr)
    # Hoisted: sin(pi*(delta_n - off)) = (-1)^off * sin(pi*delta_n) -> one EUP sin,
    # and the per-tap sign is resolved at trace time from the pre-negated copy.
    sin_pd = jnp.sin(PI * delta_n)
    neg_sin_pd = -sin_pd

    # Edge columns for the index clamp(n+off, 0, Nr-1), kept as (tile_na, 1) slices;
    # jnp.where broadcasts them along lanes (no full-size persistent broadcasts).
    left_re, left_im = mre[:, 0:1], mim[:, 0:1]
    right_re, right_im = mre[:, Nr - 1:Nr], mim[:, Nr - 1:Nr]

    acc_re = jnp.zeros((tile_na, Nr), jnp.float32)
    acc_im = jnp.zeros((tile_na, Nr), jnp.float32)
    for off in range(-(INTERP_PI // 2), INTERP_PI // 2):    # -3, -2, -1, 0, 1, 2
        if off == 0:
            tap_re, tap_im = mre, mim
        else:
            shift = ((-off) if roll_like_numpy else off) % Nr
            rolled_re = pltpu.roll(mre, shift, axis=1)       # tap[n] = m[(n+off) % Nr]
            rolled_im = pltpu.roll(mim, shift, axis=1)
            if off < 0:       # wrapped left columns -> clamped to index 0
                edge = jcol < (-off)                         # (1, Nr) lane mask
                tap_re = jnp.where(edge, left_re, rolled_re)
                tap_im = jnp.where(edge, left_im, rolled_im)
            else:             # wrapped right columns -> clamped to index Nr-1
                edge = jcol >= (Nr - off)
                tap_re = jnp.where(edge, right_re, rolled_re)
                tap_im = jnp.where(edge, right_im, rolled_im)

        x = delta_n - float(off)
        near = jnp.abs(x) < 1e-3                              # sinc singularity guard
        sin_px = sin_pd if (off % 2 == 0) else neg_sin_pd     # trace-time sign select
        # Unselected lanes may hold inf*0=NaN; the select discards them lane-wise.
        w = jnp.where(near, 1.0, sin_px * pl.reciprocal(PI * x, approx=True))
        acc_re = acc_re + tap_re * w
        acc_im = acc_im + tap_im * w

    if emit_intermediates:
        out_ref[:, 2 * Nr:3 * Nr] = acc_re
        out_ref[:, 3 * Nr:4 * Nr] = acc_im

    # ---- reference shift compensation, fused with the (-1)^(k+l) pre-IFFT sign ----
    ph2 = (-4.0 * PI * R_ref / c) * f_tau                     # (1, Nr)
    c2 = jnp.cos(ph2)
    s2 = jnp.sin(ph2)
    # (-1)^(k+l) as a parity outer product: (tile_na,1) row sign x (1,Nr) column sign.
    row_sign = jnp.where((irow & 1) == 0, 1.0, -1.0).astype(jnp.float32)
    col_sign = jnp.where((jcol & 1) == 0, 1.0, -1.0).astype(jnp.float32)
    sgn_kl = row_sign * col_sign                               # (tile_na, Nr)
    comp_re = (acc_re * c2 - acc_im * s2) * sgn_kl
    comp_im = (acc_re * s2 + acc_im * c2) * sgn_kl
    if emit_intermediates:
        out_ref[:, 4 * Nr:5 * Nr] = comp_re
        out_ref[:, 5 * Nr:6 * Nr] = comp_im
    else:
        out_ref[:, 0 * Nr:1 * Nr] = comp_re
        out_ref[:, 1 * Nr:2 * Nr] = comp_im


def wka_pallas_stage(S_2df, cfg, tile_na=None, emit_intermediates=True):
    Na, Nr = cfg.Na, cfg.Nr
    if tile_na is None:
        # v7x: split the azimuth rows across the 2 TensorCores; v5e/v6e: single step
        # (extra grid steps there only add ~0.35 us/step of pipeline overhead).
        if _num_tensorcores_per_chip() >= 2 and Na % 2 == 0 and (Na // 2) % 8 == 0:
            tile_na = Na // 2
        else:
            tile_na = Na
    assert Na % tile_na == 0
    # Scaling note: for large Na/Nr pick tile_na so ~6 live (tile_na, Nr) f32 planes
    # plus double-buffered I/O fit the scoped VMEM limit (raise vmem_limit_bytes via
    # pltpu.CompilerParams if needed); at 64x128 everything is <1 MiB.

    sre = jnp.real(S_2df).astype(jnp.float32)
    sim = jnp.imag(S_2df).astype(jnp.float32)

    f_eta_ref = float(2.0 * cfg.Vr * np.sin(cfg.theta_c) / cfg.lamda)
    n_planes = 6 if emit_intermediates else 2

    kernel = functools.partial(
        _wka_kernel,
        Vr=float(cfg.Vr), R_ref=float(cfg.R_ref), c=float(cfg.c),
        f0=float(cfg.f0), Kr=float(cfg.Kr), Fr=float(cfg.Fr), Fa=float(cfg.Fa),
        f_eta_ref=f_eta_ref, Na=Na, Nr=Nr, tile_na=tile_na,
        emit_intermediates=emit_intermediates,
        roll_like_numpy=_pltpu_roll_is_numpy_convention())

    packed = pl.pallas_call(
        kernel,
        out_shape=jax.ShapeDtypeStruct((Na, n_planes * Nr), jnp.float32),
        grid_spec=pltpu.PrefetchScalarGridSpec(
            num_scalar_prefetch=0,
            grid=(Na // tile_na,),
            in_specs=[
                pl.BlockSpec((tile_na, Nr), lambda i: (i, 0)),   # real(S_2df)
                pl.BlockSpec((tile_na, Nr), lambda i: (i, 0)),   # imag(S_2df)
            ],
            # one lane-dense packed output slab -> single DMA stream, unmasked stores
            out_specs=pl.BlockSpec((tile_na, n_planes * Nr), lambda i: (i, 0)),
        ),
        compiler_params=pltpu.CompilerParams(dimension_semantics=("parallel",)),
    )(sre, sim)

    if emit_intermediates:
        matched = packed[:, 0 * Nr:1 * Nr] + 1j * packed[:, 1 * Nr:2 * Nr]
        stolt = packed[:, 2 * Nr:3 * Nr] + 1j * packed[:, 3 * Nr:4 * Nr]
        comp_mod = packed[:, 4 * Nr:5 * Nr] + 1j * packed[:, 5 * Nr:6 * Nr]
        return matched, stolt, comp_mod          # comp_mod = comp * (-1)^(k+l)
    comp_mod = packed[:, 0 * Nr:1 * Nr] + 1j * packed[:, 1 * Nr:2 * Nr]
    return None, None, comp_mod


# ------------------------------------- forward glue -------------------------------------
def _checkerboard(Na, Nr):
    r = jnp.arange(Na, dtype=jnp.int32)[:, None]
    c = jnp.arange(Nr, dtype=jnp.int32)[None, :]
    return jnp.where(((r + c) & 1) == 0, 1.0, -1.0).astype(jnp.float32)


def wka_forward(sig, cfg, emit_intermediates=True):
    Na, Nr = cfg.Na, cfg.Nr
    # checkerboard fftshift-folding identity requires even dims (holds for 64x128)
    assert Na % 2 == 0 and Nr % 2 == 0

    chk = _checkerboard(Na, Nr)                       # (-1)^(n+m)
    sigma = 1.0 if ((Na // 2 + Nr // 2) % 2 == 0) else -1.0

    # TODO(synk): 2D FFT/IFFT have no Pallas primitive -- jnp.fft is used; the
    # fftshift/ifftshift pairs are folded into checkerboard sign modulations:
    #   fftshift(fft2(ifftshift(x)))  == sigma * chk * fft2(chk * x)
    #   fftshift(ifft2(ifftshift(y))) == sigma * chk * ifft2(chk * y)
    sig_c64 = sig.astype(jnp.complex64)
    S_2df = (sigma * chk) * jnp.fft.fft2(chk * sig_c64)

    S_2df_matched, S_2df_stolt, comp_mod = wka_pallas_stage(
        S_2df, cfg, emit_intermediates=emit_intermediates)

    # the kernel already applied the (-1)^(k+l) spectrum-side sign to comp:
    image = (sigma * chk) * jnp.fft.ifft2(comp_mod)
    return S_2df, S_2df_matched, S_2df_stolt, image


# --------------------------- pure-JAX reference (for validation) ---------------------------
def wka_reference(sig, cfg):
    """Direct (f32/complex64) port of the PyTorch WKA forward, using shift-based FFTs."""
    Na, Nr = cfg.Na, cfg.Nr
    f_eta_ref = 2.0 * cfg.Vr * np.sin(cfg.theta_c) / cfg.lamda
    f_tau = jnp.linspace(-cfg.Fr / 2, cfg.Fr / 2, Nr, dtype=jnp.float32)
    f_eta = jnp.linspace(-cfg.Fa / 2, cfg.Fa / 2, Na, dtype=jnp.float32) + float(f_eta_ref)
    f_tau2 = jnp.broadcast_to(f_tau[None, :], (Na, Nr))
    f_eta2 = jnp.broadcast_to(f_eta[:, None], (Na, Nr))

    def fft2d(x):
        return jnp.fft.fftshift(jnp.fft.fft2(jnp.fft.ifftshift(x)))

    def ifft2d(x):
        return jnp.fft.fftshift(jnp.fft.ifft2(jnp.fft.ifftshift(x)))

    S = fft2d(sig.astype(jnp.complex64))
    root = jnp.sqrt((cfg.f0 + f_tau2) ** 2 - (cfg.c * f_eta2 / (2.0 * cfg.Vr)) ** 2)
    H = jnp.exp(1j * (4.0 * np.pi * cfg.R_ref / cfg.c * root + np.pi * f_tau2 ** 2 / cfg.Kr))
    Sm = S * H

    delta_n = (root - cfg.f0 - f_tau2) * (Nr / cfg.Fr)
    offs = jnp.arange(-INTERP_PI // 2, INTERP_PI // 2)                     # -3..2
    idx = jnp.clip(jnp.arange(Nr)[:, None] + offs[None, :], 0, Nr - 1)     # (Nr, 6)
    samples = Sm[:, idx]                                                   # (Na, Nr, 6)
    w = jnp.sinc(delta_n[:, :, None] - offs[None, None, :].astype(jnp.float32))
    S_stolt = jnp.sum(samples * w, axis=2)

    phase = jnp.exp(-1j * 4.0 * np.pi * cfg.R_ref / cfg.c * f_tau)
    S_comp = S_stolt * phase[None, :]
    image = ifft2d(S_comp)
    return S, Sm, S_stolt, image


if __name__ == "__main__":
    cfg = WKAConfig()
    key = jax.random.PRNGKey(0)
    kr, ki = jax.random.split(key)
    sig = (jax.random.normal(kr, (cfg.Na, cfg.Nr), dtype=jnp.float32)
           + 1j * jax.random.normal(ki, (cfg.Na, cfg.Nr), dtype=jnp.float32)
           ).astype(jnp.complex64)

    # resolve capability probes eagerly (cached) before jit tracing
    _pltpu_roll_is_numpy_convention()
    _num_tensorcores_per_chip()

    fwd = jax.jit(lambda s: wka_forward(s, cfg))
    outs = jax.block_until_ready(fwd(sig))
    refs = jax.block_until_ready(wka_reference(sig, cfg))

    for name, got, want in zip(("S_2df", "matched", "stolt", "image"), outs, refs):
        assert bool(jnp.all(jnp.isfinite(jnp.abs(got)))), f"non-finite values in {name}"
        scale = float(jnp.max(jnp.abs(want))) + 1e-30
        err = float(jnp.max(jnp.abs(got - want))) / scale
        assert err < 5e-2, f"{name}: relative error {err:.3e} exceeds tolerance"

    print("KERNEL_OK")
</pallas_src>

<mosaic_0001>
module attributes {stable_mosaic.version = 11 : i64} {
  func.func @probe(%arg0: memref<8x128xf32, #tpu.memory_space<vmem>>, %arg1: memref<8x128xf32, #tpu.memory_space<vmem>>) attributes {dimension_semantics = [], scalar_prefetch = 0 : i64, scratch_operands = 0 : i64, tpu.core_type = #tpu.core_type<tc>} {
    %c0 = arith.constant 0 : index
    %c0_0 = arith.constant 0 : index
    %0 = vector.load %arg0[%c0, %c0_0] : memref<8x128xf32, #tpu.memory_space<vmem>>, vector<8x128xf32>
    %c1_i32 = arith.constant 1 : i32
    %1 = tpu.dynamic_rotate %0 by %c1_i32 dim 1 : vector<8x128xf32>, i32 -> vector<8x128xf32>
    %c0_1 = arith.constant 0 : index
    %c0_2 = arith.constant 0 : index
    %2 = vector.load %arg1[%c0_1, %c0_2] : memref<8x128xf32, #tpu.memory_space<vmem>>, vector<8x128xf32>
    tpu.vector_store %arg1[%c0_1, %c0_2], %1 {strides = array<i32>} : memref<8x128xf32, #tpu.memory_space<vmem>>, vector<8x128xf32>,
    return
  }
}

</mosaic_0001>

<llo_original>
// kernel: tpu_custom_call.1
$region0: #{tpu_custom_call.1}
  #allocation0 [shape = 'u32[]', space=smem, size = 0x4, offset = 0x4, fixed_abs, tag = 'smem constant byte address 0x4 - core index']
  #allocation1 [shape = 'u32[144,128]{1,0:T(1,128)}', space=vmem, size = 0x12000, scoped, tag = 'internal scratch']
  %s0 = inlined_call_operand.hbm [shape: f32[8,128], index: 0, kind: input, shape index: {}]
  %s1 = inlined_call_operand.hbm [shape: f32[8,128], index: 1, kind: output, shape index: {}]
  %s2 = sld [smem:[#allocation0]]
  $region18: #{tpu_custom_call.1} parent=0
    _
  %s4 = ssub.s32 1, %s2
  %s5 = scalar_select 0, %s4, %s2
  $region1: #{tpu_custom_call.1} parent=0
    #allocation2 [shape = 'u8[4096]{0}', space=vmem, size = 0x1000, scoped, tag = 'input window, operand 0, single buffered']
    #allocation3 [shape = 's32[1]{0}', space=sflag, size = 0x4, scoped, tag = 'scoped memory for tpu_custom_call.1']
    #allocation4 [shape = 's32[1]{0}', space=sflag, size = 0x4, scoped, tag = 'scoped memory for tpu_custom_call.1']
    #allocation5 [shape = 'u8[4096]{0}', space=vmem, size = 0x1000, scoped, tag = 'output window, operand 0, single buffered']
    %6 = vsyncpa [#allocation3], 0
    %7 = vsyncpa [#allocation4], 0
    // Predicated region
    $region2: #{tpu_custom_call.1} parent=1 // pred_check
      _
    $region3: #{tpu_custom_call.1} parent=1 // pred_check_branch
      %9 = sbr.rel (0) target = $region5
    $region4: #{tpu_custom_call.1} parent=1 // pred_region
      %s11 = ssub.s32 128, 128
      %12 = vsyncadd [#allocation3], %s11
      %s14 = sshll.u32 [#allocation2], 4
      %s15 = int_to_ptr.vmem [resolvable:$true] %s14
      %17 = dma.hbm_to_vmem [thread:$0]  %s0, 128, %s15, [#allocation3]
    $region5: #{tpu_custom_call.1} parent=1 // pred_fallthru
      _
    // Predicated region
    $region6: #{tpu_custom_call.1} parent=1 // pred_check
      _
    $region7: #{tpu_custom_call.1} parent=1 // pred_check_branch
      %19 = sbr.rel (0) target = $region9
    $region8: #{tpu_custom_call.1} parent=1 // pred_region
      %20 = dma.done [#allocation3], 128
    $region9: #{tpu_custom_call.1} parent=1 // pred_fallthru
      _
    %v21 = vld [vmem:[#allocation2] sm:$0xff]
    %22 = vrot.lane.b32.xlu0 %v21, 1
    %v23 = vpop.permute.xlu0 %22
    %24 = vst [vmem:[#allocation5] sm:$0xff] %v23
    // Predicated region
    $region10: #{tpu_custom_call.1} parent=1 // pred_check
      _
    $region11: #{tpu_custom_call.1} parent=1 // pred_check_branch
      %26 = sbr.rel (0) target = $region13
    $region12: #{tpu_custom_call.1} parent=1 // pred_region
      %s28 = ssub.s32 128, 128
      %29 = vsyncadd [#allocation4], %s28
      %s31 = sshll.u32 [#allocation5], 4
      %s32 = int_to_ptr.vmem [resolvable:$true] %s31
      %34 = dma.vmem_to_hbm [thread:$0]  %s32, 128, %s1, [#allocation4]
    $region13: #{tpu_custom_call.1} parent=1 // pred_fallthru
      _
    // Predicated region
    $region14: #{tpu_custom_call.1} parent=1 // pred_check
      _
    $region15: #{tpu_custom_call.1} parent=1 // pred_check_branch
      %36 = sbr.rel (0) target = $region17
    $region16: #{tpu_custom_call.1} parent=1 // pred_region
      %37 = dma.done [#allocation4], 128
    $region17: #{tpu_custom_call.1} parent=1 // pred_fallthru
      _
    %38 = vsyncpa [#allocation3], 1
    %39 = vsyncpa [#allocation4], 1

</llo_original>
